<compile_context>
chip_gen: v7x
topology: tpu7x:2x2x1
jax: 0.10.0
libtpu: 0.0.40
codegen_flags: <defaults>
</compile_context>

<pallas_src>
import jax
import jax.numpy as jnp
from jax.experimental import pallas as pl
from jax.experimental.pallas import tpu as pltpu

_LANE_CANDIDATES = (2048, 1024, 512, 256, 128)


def _sublane_pack(itemsize):
    """Rows per vreg: 8 for 32-bit, 16 for bf16/fp16, 32 for int8/fp8."""
    return 8 * max(1, 4 // max(1, itemsize))


def _device_block_bytes():
    """Generation-aware per-operand block size (bytes)."""
    try:
        kind = jax.devices()[0].device_kind.lower()
    except Exception:
        kind = ""
    # v5e (~0.82 TB/s): 4 MiB blocks already amortize the per-step overhead.
    if any(tag in kind for tag in ("v2", "v3", "v4", "v5")):
        return 4 << 20
    # v6e / v7x: 8 MiB blocks; working set 6 x 8 MiB = 48 MiB < 64 MiB/TC.
    return 8 << 20


def _mixup_kernel(y_ref, x1_ref, x2_ref, o_ref):
    """o = x2 + y * (x1 - x2)  (== x1*y + x2*(1-y)); y is an f32 SMEM scalar."""
    y = y_ref[0]
    x1 = x1_ref[...].astype(jnp.float32)
    x2 = x2_ref[...].astype(jnp.float32)
    o_ref[...] = (x2 + y * (x1 - x2)).astype(o_ref.dtype)


def _pick_lane(n, pack):
    """Lane width for an exactly-divisible flat size n (None if ragged)."""
    # Prefer the largest lane whose row count is >= pack and a pack multiple:
    # fully dense vregs, unmasked vld/vst.
    for cand in _LANE_CANDIDATES:
        if n % cand == 0:
            rows = n // cand
            if rows >= pack and rows % pack == 0:
                return cand
    # Otherwise any exact divisor (last vreg row-group may be partially live).
    for cand in _LANE_CANDIDATES:
        if n % cand == 0:
            return cand
    return None


def _pick_head_lane(n, pack):
    """Lane width for the lane-aligned head of a ragged flat size n."""
    for cand in _LANE_CANDIDATES:
        if n // cand >= pack:
            return cand
    for cand in reversed(_LANE_CANDIDATES):
        if n // cand >= 1:
            return cand
    return None


def _run_mixup_2d(y_smem, x1_2d, x2_2d):
    """Run the streaming mixup kernel over a (rows, lane) slab."""
    rows, lane = x1_2d.shape
    dtype = x1_2d.dtype
    itemsize = jnp.dtype(dtype).itemsize
    pack = _sublane_pack(itemsize)
    block_bytes = _device_block_bytes()

    # Pack-aligned row cap so one operand block is <= block_bytes.
    cap = max(pack, (block_bytes // (lane * itemsize)) // pack * pack)
    block_rows = rows if rows <= cap else cap
    # Partial last block is fine: the kernel is pure write-only on o_ref, so
    # OOB rows are read as padding and their writes are dropped.
    grid = (pl.cdiv(rows, block_rows),)

    actual_block_bytes = block_rows * lane * itemsize
    # 2 pipeline buffers x 3 streamed operands + slack, derived from the plan.
    # Stays within v7x's 64 MiB/TC while covering v5e's 16 MiB scoped default.
    vmem_limit = min(max(6 * actual_block_bytes + (4 << 20), 16 << 20), 100 << 20)

    n = rows * lane
    return pl.pallas_call(
        _mixup_kernel,
        out_shape=jax.ShapeDtypeStruct((rows, lane), dtype),
        grid=grid,
        in_specs=[
            pl.BlockSpec(memory_space=pltpu.SMEM),                  # scalar y
            pl.BlockSpec((block_rows, lane), lambda i: (i, 0)),     # x1 tile
            pl.BlockSpec((block_rows, lane), lambda i: (i, 0)),     # x2 tile
        ],
        out_specs=pl.BlockSpec((block_rows, lane), lambda i: (i, 0)),
        compiler_params=pltpu.CompilerParams(
            # "parallel" lets the scheduler shard the streaming grid across
            # both v7x TensorCores; near-zero effect on single-TC v5e/v6e.
            dimension_semantics=("parallel",),
            vmem_limit_bytes=vmem_limit,
        ),
        cost_estimate=pl.CostEstimate(
            flops=2 * n, transcendentals=0, bytes_accessed=3 * n * itemsize),
    )(y_smem, x1_2d, x2_2d)


@jax.jit
def latent_aug(x1, x2, y):
    """Pallas TPU implementation of LatentAug.forward: x1*y + x2*(1-y)."""
    assert x1.shape == x2.shape and x1.dtype == x2.dtype
    orig_shape = x1.shape
    dtype = x1.dtype
    itemsize = jnp.dtype(dtype).itemsize
    pack = _sublane_pack(itemsize)
    n = x1.size

    # Keep y as an f32 scalar (SMEM scalars are 32-bit); matches the PyTorch
    # float64 scalar mix to ~1e-7 relative for f32/bf16 latents.
    y32 = jnp.asarray(y, jnp.float32)
    y_smem = y32.reshape((1,))

    def _jnp_mix(a, b):
        af = a.astype(jnp.float32)
        bf = b.astype(jnp.float32)
        return (bf + y32 * (af - bf)).astype(dtype)

    lane = _pick_lane(n, pack)
    if lane is not None:
        # Common aligned path: zero-copy reshape, single streaming pass.
        rows = n // lane
        out = _run_mixup_2d(y_smem, x1.reshape(rows, lane), x2.reshape(rows, lane))
        return out.reshape(orig_shape)

    # Ragged size (n % 128 != 0): lane-aligned head through the kernel plus a
    # tiny (< lane) jnp tail — no whole-array pad / output-slice HBM passes.
    x1f = x1.reshape(-1)
    x2f = x2.reshape(-1)
    head_lane = _pick_head_lane(n, pack)
    if head_lane is None:
        # Tensor smaller than one lane: pure jnp is cheaper than any kernel.
        return _jnp_mix(x1f, x2f).reshape(orig_shape)

    head_rows = n // head_lane
    head_n = head_rows * head_lane
    head = _run_mixup_2d(
        y_smem,
        x1f[:head_n].reshape(head_rows, head_lane),
        x2f[:head_n].reshape(head_rows, head_lane),
    ).reshape(-1)
    tail = _jnp_mix(x1f[head_n:], x2f[head_n:])
    return jnp.concatenate([head, tail]).reshape(orig_shape)


if __name__ == "__main__":
    key = jax.random.PRNGKey(0)
    k1, k2, k3 = jax.random.split(key, 3)

    # Small NCHW-style latents, consistent with the module's forward.
    B, C, H, W = 2, 4, 16, 16
    x1 = jax.random.normal(k1, (B, C, H, W), dtype=jnp.float32)
    x2 = jax.random.normal(k2, (B, C, H, W), dtype=jnp.float32)

    # y = np.random.beta(1, 1) -> Beta(1,1) == Uniform(0,1); sampled
    # deterministically with JAX PRNG instead of numpy's global RNG.
    y = jax.random.beta(k3, 1.0, 1.0)

    out = jax.block_until_ready(latent_aug(x1, x2, y))

    # Pure-JAX reference check (aligned path).
    ref = x1 * y + x2 * (1.0 - y)
    assert out.shape == (B, C, H, W)
    assert jnp.allclose(out, ref, atol=1e-5, rtol=1e-5)

    # Exercise the ragged (head + jnp tail) path once as well.
    xr1 = jax.random.normal(k1, (3, 5, 7, 11), dtype=jnp.float32)
    xr2 = jax.random.normal(k2, (3, 5, 7, 11), dtype=jnp.float32)
    outr = jax.block_until_ready(latent_aug(xr1, xr2, y))
    refr = xr1 * y + xr2 * (1.0 - y)
    assert outr.shape == (3, 5, 7, 11)
    assert jnp.allclose(outr, refr, atol=1e-5, rtol=1e-5)

    print("KERNEL_OK")
</pallas_src>

<mosaic_0001>
module attributes {stable_mosaic.version = 11 : i64} {
  func.func @_mixup_kernel(%arg0: i32, %arg1: memref<1xf32, #tpu.memory_space<smem>>, %arg2: memref<8x256xf32, #tpu.memory_space<vmem>>, %arg3: memref<8x256xf32, #tpu.memory_space<vmem>>, %arg4: memref<8x256xf32, #tpu.memory_space<vmem>>) attributes {dimension_semantics = [#tpu.dimension_semantics<parallel>], iteration_bounds = array<i64: 1>, scalar_prefetch = 0 : i64, scratch_operands = 0 : i64, tpu.core_type = #tpu.core_type<tc>, window_params = [{transform_indices = @transform_0, window_bounds = array<i64: 1>}, {transform_indices = @transform_1, window_bounds = array<i64: 8, 256>}, {transform_indices = @transform_2, window_bounds = array<i64: 8, 256>}, {transform_indices = @transform_3, window_bounds = array<i64: 8, 256>}]} {
    %c0 = arith.constant 0 : index
    %0 = memref.load %arg1[%c0] : memref<1xf32, #tpu.memory_space<smem>>
    %c0_0 = arith.constant 0 : index
    %c0_1 = arith.constant 0 : index
    %1 = vector.load %arg2[%c0_0, %c0_1] : memref<8x256xf32, #tpu.memory_space<vmem>>, vector<8x256xf32>
    %c0_2 = arith.constant 0 : index
    %c0_3 = arith.constant 0 : index
    %2 = vector.load %arg3[%c0_2, %c0_3] : memref<8x256xf32, #tpu.memory_space<vmem>>, vector<8x256xf32>
    %3 = arith.subf %1, %2 : vector<8x256xf32>
    %4 = vector.broadcast %0 : f32 to vector<8x256xf32>
    %5 = arith.mulf %4, %3 : vector<8x256xf32>
    %6 = arith.addf %2, %5 : vector<8x256xf32>
    %c0_4 = arith.constant 0 : index
    %c0_5 = arith.constant 0 : index
    %7 = vector.load %arg4[%c0_4, %c0_5] : memref<8x256xf32, #tpu.memory_space<vmem>>, vector<8x256xf32>
    tpu.vector_store %arg4[%c0_4, %c0_5], %6 {strides = array<i32>} : memref<8x256xf32, #tpu.memory_space<vmem>>, vector<8x256xf32>,
    return
  }
  func.func @transform_0(%arg0: i32) -> i32 {
    %c0_i32 = arith.constant 0 : i32
    %c0_i32_0 = arith.constant 0 : i32
    return %c0_i32 : i32
  }
  func.func @transform_1(%arg0: i32) -> (i32, i32) {
    %c0_i32 = arith.constant 0 : i32
    %c0_i32_0 = arith.constant 0 : i32
    return %arg0, %c0_i32 : i32, i32
  }
  func.func @transform_2(%arg0: i32) -> (i32, i32) {
    %c0_i32 = arith.constant 0 : i32
    %c0_i32_0 = arith.constant 0 : i32
    return %arg0, %c0_i32 : i32, i32
  }
  func.func @transform_3(%arg0: i32) -> (i32, i32) {
    %c0_i32 = arith.constant 0 : i32
    %c0_i32_0 = arith.constant 0 : i32
    return %arg0, %c0_i32 : i32, i32
  }
}

</mosaic_0001>

<llo_original>
// kernel: latent_aug.1
$region0: #{latent_aug.1}
  #allocation0 [shape = 'u32[]', space=smem, size = 0x4, offset = 0x4, fixed_abs, tag = 'smem constant byte address 0x4 - core index']
  #allocation1 [shape = 'u32[144,128]{1,0:T(1,128)}', space=vmem, size = 0x12000, scoped, tag = 'internal scratch']
  #allocation2 [shape = 'f32[1]{0:T(128)S(6)}', space=smem, size = 0x200, scoped, tag = 'scoped memory for latent_aug.1']
  %s0 = inlined_call_operand.<no memory space> [shape: f32[1], index: 0, kind: input, shape index: {}]
  %s1 = inlined_call_operand.vmem [shape: f32[8,256], index: 1, kind: input, shape index: {}]
  %s2 = inlined_call_operand.vmem [shape: f32[8,256], index: 2, kind: input, shape index: {}]
  %s3 = inlined_call_operand.vmem [shape: f32[8,256], index: 3, kind: output, shape index: {}]
  %s4 = sld [smem:[#allocation0]]
  $region22: #{latent_aug.1} parent=0
    _
  %s6 = ssub.s32 1, %s4
  %s7 = scalar_select 0, %s6, %s4
  %8 = sst [smem:[#allocation2]] %s0
  // Predicated region
  $region2: #{latent_aug.1} parent=0 // pred_check
    _
  $region3: #{latent_aug.1} parent=0 // pred_check_branch
    %10 = sbr.rel (0) target = $region5
  $region4: #{latent_aug.1} parent=0 // pred_region
    _
  $region5: #{latent_aug.1} parent=0 // pred_fallthru
    _
  // Predicated region
  $region6: #{latent_aug.1} parent=0 // pred_check
    _
  $region7: #{latent_aug.1} parent=0 // pred_check_branch
    %12 = sbr.rel (0) target = $region9
  $region8: #{latent_aug.1} parent=0 // pred_region
    _
  $region9: #{latent_aug.1} parent=0 // pred_fallthru
    _
  // Predicated region
  $region10: #{latent_aug.1} parent=0 // pred_check
    _
  $region11: #{latent_aug.1} parent=0 // pred_check_branch
    %14 = sbr.rel (0) target = $region13
  $region12: #{latent_aug.1} parent=0 // pred_region
    _
  $region13: #{latent_aug.1} parent=0 // pred_fallthru
    _
  %s15 = sld [smem:[#allocation2]]
  %v16 = vld [vmem:[%s1] sm:$0xff]
  %v17 = vld [vmem:[%s1 + $0x8] sm:$0xff]
  %v18 = vld [vmem:[%s2] sm:$0xff]
  %v19 = vld [vmem:[%s2 + $0x8] sm:$0xff]
  %v20 = vsub.f32 %v16, %v18
  %v21 = vsub.f32 %v17, %v19
  %v22 = vstv %s15
  %v23 = vmul.f32 %v22, %v20
  %v24 = vmul.f32 %v22, %v21
  %v25 = vadd.f32 %v18, %v23
  %v26 = vadd.f32 %v19, %v24
  %27 = vst [vmem:[%s3] sm:$0xff] %v25
  %28 = vst [vmem:[%s3 + $0x8] sm:$0xff] %v26
  // Predicated region
  $region14: #{latent_aug.1} parent=0 // pred_check
    _
  $region15: #{latent_aug.1} parent=0 // pred_check_branch
    %30 = sbr.rel (0) target = $region17
  $region16: #{latent_aug.1} parent=0 // pred_region
    _
  $region17: #{latent_aug.1} parent=0 // pred_fallthru
    _
  // Predicated region
  $region18: #{latent_aug.1} parent=0 // pred_check
    _
  $region19: #{latent_aug.1} parent=0 // pred_check_branch
    %32 = sbr.rel (0) target = $region21
  $region20: #{latent_aug.1} parent=0 // pred_region
    _
  $region21: #{latent_aug.1} parent=0 // pred_fallthru
    _

</llo_original>
